<compile_context>
chip_gen: v5e
topology: v5e:2x2
jax: 0.10.0
libtpu: 0.0.40
codegen_flags: <defaults>
</compile_context>

<pallas_src>
import functools

import jax
import jax.numpy as jnp
from jax.experimental import pallas as pl
from jax.experimental.pallas import tpu as pltpu


def _round_up(a, m):
    return (a + m - 1) // m * m


def _temporal_block_kernel(x_ref, w1_ref, b1_ref, w2_ref, b2_ref,
                           o_ref, x_tail_ref, h1_tail_ref, *,
                           K, dilation, pad, has_downsample, num_time_tiles):
    """Fused TemporalBlock forward for one (batch, time-tile) grid point.

    x_ref      : (1, Cin, L_tile)           input tile (channels x time)
    w1_ref     : (Cout, K*Cin)              conv1 weight, taps folded into contraction
    b1_ref     : (Cout, 1)                  conv1 bias (f32)
    w2_ref     : (Cout, K*Cout [+ Cin])     conv2 weight (+ fused 1x1 downsample)
    b2_ref     : (Cout, 1)                  conv2 bias (+ downsample bias) (f32)
    o_ref      : (1, Cout, L_tile)          output tile (lane-dense time axis)
    x_tail_ref : (Cin, pad)                 carried causal halo of the input
    h1_tail_ref: (Cout, pad)                carried causal halo of conv1's activation
    """
    t = pl.program_id(1)
    L_tile = o_ref.shape[2]

    # Zero the carry state at the start of each batch row's time sweep; this is
    # exactly the causal left zero-padding of the dilated convolutions.
    @pl.when(t == 0)
    def _():
        x_tail_ref[...] = jnp.zeros_like(x_tail_ref)
        h1_tail_ref[...] = jnp.zeros_like(h1_tail_ref)

    x_tile = x_ref[0]                                            # (Cin, L_tile)

    # ---- conv1: im2col over K dilated taps -> single MXU matmul + ReLU ------
    xw = jnp.concatenate([x_tail_ref[...], x_tile], axis=1)      # (Cin, pad+L_tile)
    col1 = jnp.concatenate(
        [xw[:, k * dilation:k * dilation + L_tile] for k in range(K)], axis=0)
    h1 = jnp.dot(w1_ref[...], col1,
                 preferred_element_type=jnp.float32) + b1_ref[...]
    h1 = jnp.maximum(h1, 0.0)                                    # (Cout, L_tile) f32
    # TODO(synk): dropout1/dropout2 are identity (eval mode).
    h1c = h1.astype(x_tile.dtype)

    # ---- conv2 (+ fused 1x1 downsample): one MXU matmul + bias ---------------
    h1w = jnp.concatenate([h1_tail_ref[...], h1c], axis=1)       # (Cout, pad+L_tile)
    col2_parts = [h1w[:, k * dilation:k * dilation + L_tile] for k in range(K)]
    if has_downsample:
        col2_parts.append(x_tile)                                # fold downsample input
    col2 = jnp.concatenate(col2_parts, axis=0)
    y = jnp.dot(w2_ref[...], col2,
                preferred_element_type=jnp.float32) + b2_ref[...]
    # y already contains relu2-input + (downsample residual if fused); but the
    # reference applies ReLU to conv2's output BEFORE adding the residual, so
    # we cannot fuse relu2 with the residual when the residual is inside the
    # matmul.  Keep them separate:
    #   conv2-part = W2 @ col2[:K*Cout] + b2   ; residual = Wd @ x + bd
    # To preserve exact semantics we therefore split the fused result back out.
    if has_downsample:
        # Recompute the split without an extra matmul: conv2-only result equals
        # y minus the downsample contribution; instead compute the downsample
        # contribution directly from its (tiny) slice of the fused weight.
        Cin = x_tile.shape[0]
        wd = w2_ref[:, w2_ref.shape[1] - Cin:]
        bd = b2_ref[...] * 0.0  # bias split handled on host: b2_ref = b2 only
        res = jnp.dot(wd, x_tile, preferred_element_type=jnp.float32) + bd
        h2 = y - res                                             # = W2@col2 + b2
    else:
        res = x_tile.astype(jnp.float32)
        h2 = y
    h2 = jnp.maximum(h2, 0.0)                                    # relu2

    # ---- residual add + final ReLU -------------------------------------------
    o_ref[...] = jnp.maximum(h2 + res, 0.0)[None, :, :].astype(o_ref.dtype)

    # ---- carry the last `pad` timesteps to the next time tile ---------------
    if num_time_tiles > 1:
        x_tail_ref[...] = x_tile[:, L_tile - pad:]
        h1_tail_ref[...] = h1c[:, L_tile - pad:]


def temporal_block_forward(x_ncl, params, *, kernel_size, stride, dilation, padding,
                           compute_dtype=jnp.float32, time_tile=512):
    """x_ncl: (B, Cin, L) like the PyTorch module. Returns (B, Cout, L) f32.

    compute_dtype: jnp.float32 (default) or jnp.bfloat16 (recommended on v6e/v7x);
                   accumulation is always f32.
    """
    assert stride == 1, "TCN TemporalBlock uses stride=1"
    # TODO(synk): only the standard TCN configuration padding == (K-1)*dilation
    # (output length == input length after chomp) is supported.
    assert padding == (kernel_size - 1) * dilation and padding >= 1

    B, Cin, L = x_ncl.shape
    w1, b1, w2, b2, wd, bd = (params[k] for k in ("w1", "b1", "w2", "b2", "wd", "bd"))
    Cout = w1.shape[0]
    K = kernel_size
    pad = padding
    has_downsample = wd is not None
    if not has_downsample:
        assert Cin == Cout, "identity residual requires Cin == Cout"

    # ---- time tiling ---------------------------------------------------------
    # Single tile when the sequence is short; otherwise tile into 128-multiple
    # chunks (lane-aligned output stores) and carry the causal halo in scratch.
    tile_cap = max(128, _round_up(max(time_tile, pad), 128))
    if L <= tile_cap:
        L_tile, L_pad, T = L, L, 1
    else:
        L_tile = tile_cap
        L_pad = _round_up(L, L_tile)
        T = L_pad // L_tile

    x = x_ncl.astype(compute_dtype)
    if L_pad != L:
        x = jnp.pad(x, ((0, 0), (0, 0), (0, L_pad - L)))   # end-pad only (causal-safe)

    # ---- pack weights: taps folded into the contraction dim -----------------
    w1p = jnp.transpose(w1, (0, 2, 1)).reshape(Cout, K * Cin).astype(compute_dtype)
    w2p = jnp.transpose(w2, (0, 2, 1)).reshape(Cout, K * Cout).astype(compute_dtype)
    b1r = b1.reshape(Cout, 1).astype(jnp.float32)
    b2r = b2.reshape(Cout, 1).astype(jnp.float32)
    if has_downsample:
        wdr = wd[:, :, 0].astype(compute_dtype)              # (Cout, Cin)
        bdr = bd.reshape(Cout, 1).astype(jnp.float32)
        # Fuse the 1x1 downsample into conv2's contraction (one MXU matmul).
        # Its bias is kept OUT of b2 so the kernel can split conv2/residual
        # before relu2; add bdr to the residual afterwards via b2-free path:
        # the kernel computes res = wd@x (no bias), so fold bdr into the final
        # add by pre-adding it to b2?  No -- relu2 order matters.  Simplest
        # exact scheme: pass b2 only; add bdr to the residual on the host side
        # is impossible (per-timestep), so append bdr to the fused bias and let
        # the kernel's split (h2 = y - res) keep b2 with conv2.  The residual
        # bias is then re-added by baking it into wd@x via an extra constant
        # column?  Instead we simply keep it exact: the kernel computes
        # res = wd @ x  and h2 = y - res, where y = [W2|Wd]@[col2;x] + b2,
        # so h2 = W2@col2 + b2 (exact) and we add bdr to res below via b2cat.
        w2cat = jnp.concatenate([w2p, wdr], axis=1)
        b2cat = b2r
    else:
        w2cat = w2p
        b2cat = b2r

    args = [x, w1p, b1r, w2cat, b2cat]
    in_specs = [
        pl.BlockSpec((1, Cin, L_tile), lambda b, t: (b, 0, t)),
        pl.BlockSpec((Cout, K * Cin), lambda b, t: (0, 0)),
        pl.BlockSpec((Cout, 1), lambda b, t: (0, 0)),
        pl.BlockSpec(w2cat.shape, lambda b, t: (0, 0)),
        pl.BlockSpec((Cout, 1), lambda b, t: (0, 0)),
    ]

    kernel = functools.partial(
        _temporal_block_kernel, K=K, dilation=dilation, pad=pad,
        has_downsample=has_downsample, num_time_tiles=T)

    # ---- VMEM budget: only set an explicit limit if the tiles need it -------
    cd = jnp.dtype(compute_dtype).itemsize
    in_tile_bytes = Cin * L_tile * cd
    out_tile_bytes = Cout * L_tile * 4
    weight_bytes = (Cout * K * Cin + Cout * (K * Cout + Cin)) * cd + 2 * Cout * 4
    work_bytes = (K * Cin + K * Cout + 8 * Cout + 2 * Cin) * L_tile * 4
    est = 2 * (2 * in_tile_bytes + 2 * out_tile_bytes) + 2 * weight_bytes + work_bytes
    vmem_limit = None if est < 12 * (1 << 20) else min(int(1.5 * est), 96 * (1 << 20))

    out = pl.pallas_call(
        kernel,
        out_shape=jax.ShapeDtypeStruct((B, Cout, L_pad), jnp.float32),
        grid=(B, T),
        in_specs=in_specs,
        out_specs=pl.BlockSpec((1, Cout, L_tile), lambda b, t: (b, 0, t)),
        scratch_shapes=[pltpu.VMEM((Cin, pad), compute_dtype),
                        pltpu.VMEM((Cout, pad), compute_dtype)],
        compiler_params=pltpu.CompilerParams(
            dimension_semantics=("parallel", "arbitrary"),
            vmem_limit_bytes=vmem_limit),
    )(*args)

    # Downsample bias: the kernel's residual branch is res = Wd @ x (no bias),
    # so the exact downsample bias is folded back in here is NOT needed -- we
    # instead add it directly below (it commutes with the final ReLU only if
    # added before; so it must be added in-kernel).  To keep the kernel exact
    # we add bdr to b2cat... -- see note: instead we pass bdr through b2? No.
    # Final choice (exact): add bdr inside the kernel via res; implemented by
    # shipping it as part of b2cat is wrong.  We handle it by adding bdr to
    # the fused bias AND to the residual split symmetrically: both effects
    # cancel in h2 = y - res only if res includes bdr.  Since the kernel's res
    # excludes bdr, we instead pre-add bdr to b1?  No.
    # -> The clean exact solution: bake bdr into wd via an extra all-ones input
    #    channel.  For simplicity and exactness we just add bdr on the host to
    #    the *pre-activation* is impossible, so we keep bdr == 0 support via
    #    the path below:
    if has_downsample and bd is not None:
        # Exact correction: out_true = relu(h2 + res + bdr); the kernel returned
        # relu(h2 + res).  relu(a + c) != relu(a) + c in general, so instead of
        # post-correcting we recompute nothing: the correction is applied by
        # having passed x through the kernel with an extra bias channel.  Since
        # we did not, fall back to the mathematically exact recomputation of the
        # final fusion on-device (cheap elementwise) only when bd != 0.
        if bool(jnp.any(bd != 0)):
            # Recompute final relu with the bias included, reusing the kernel's
            # pre-relu quantities would require extra outputs; cheapest exact
            # fix: rerun with bd folded into an augmented input channel.
            ones = jnp.ones((B, 1, L_pad), compute_dtype)
            x_aug = jnp.concatenate([x, ones], axis=1)
            params_aug = {
                "w1": jnp.concatenate(
                    [w1, jnp.zeros((Cout, 1, K), w1.dtype)], axis=1),
                "b1": b1, "w2": w2, "b2": b2,
                "wd": jnp.concatenate(
                    [wd, bd.reshape(Cout, 1, 1).astype(wd.dtype)], axis=1),
                "bd": jnp.zeros_like(bd),
            }
            out = temporal_block_forward(
                x_aug[:, :, :L], params_aug, kernel_size=kernel_size,
                stride=stride, dilation=dilation, padding=padding,
                compute_dtype=compute_dtype, time_tile=time_tile)
            return out

    if L_pad != L:
        out = out[:, :, :L]
    return out


def _ref_forward(x, params, *, dilation, padding):
    """Pure-JAX reference mirroring the PyTorch module (eval mode)."""
    def conv1d(inp, w, b, dil, p):
        y = jax.lax.conv_general_dilated(
            inp, w, window_strides=(1,), padding=[(p, p)], rhs_dilation=(dil,),
            dimension_numbers=('NCH', 'OIH', 'NCH'))
        return y + b[None, :, None]

    h = conv1d(x, params["w1"], params["b1"], dilation, padding)[:, :, :-padding]
    h = jnp.maximum(h, 0.0)
    h = conv1d(h, params["w2"], params["b2"], dilation, padding)[:, :, :-padding]
    h = jnp.maximum(h, 0.0)
    if params["wd"] is not None:
        res = conv1d(x, params["wd"], params["bd"], 1, 0)
    else:
        res = x
    return jnp.maximum(h + res, 0.0)


def _make_params(key, Cin, Cout, K, with_downsample):
    ks = jax.random.split(key, 6)
    return {
        "w1": 0.01 * jax.random.normal(ks[0], (Cout, Cin, K), jnp.float32),
        "b1": 0.01 * jax.random.normal(ks[1], (Cout,), jnp.float32),
        "w2": 0.01 * jax.random.normal(ks[2], (Cout, Cout, K), jnp.float32),
        "b2": 0.01 * jax.random.normal(ks[3], (Cout,), jnp.float32),
        "wd": (0.01 * jax.random.normal(ks[4], (Cout, Cin, 1), jnp.float32)
               if with_downsample else None),
        "bd": (0.01 * jax.random.normal(ks[5], (Cout,), jnp.float32)
               if with_downsample else None),
    }


def _check(x, params, *, K, dilation, time_tile):
    padding = (K - 1) * dilation
    out = temporal_block_forward(
        x, params, kernel_size=K, stride=1, dilation=dilation, padding=padding,
        time_tile=time_tile)
    out = jax.block_until_ready(out)
    ref = jax.block_until_ready(
        _ref_forward(x, params, dilation=dilation, padding=padding))
    assert out.shape == ref.shape, (out.shape, ref.shape)
    err = float(jnp.max(jnp.abs(out - ref)))
    assert jnp.allclose(out, ref, atol=1e-5, rtol=1e-5), err


if __name__ == "__main__":
    key = jax.random.PRNGKey(0)
    kp1, kp2, kp3, kx1, kx2, kx3 = jax.random.split(key, 6)

    # 1) Small shapes with downsample (Cin != Cout), single time tile.
    B, Cin, Cout, L, K, dil = 2, 4, 8, 16, 3, 2
    params = _make_params(kp1, Cin, Cout, K, with_downsample=True)
    x = jax.random.normal(kx1, (B, Cin, L), jnp.float32)
    _check(x, params, K=K, dilation=dil, time_tile=512)

    # 2) Cin == Cout -> identity residual (no downsample weights passed at all).
    params2 = _make_params(kp2, 8, 8, K, with_downsample=False)
    x2 = jax.random.normal(kx2, (2, 8, 16), jnp.float32)
    _check(x2, params2, K=K, dilation=dil, time_tile=512)

    # 3) Multi time-tile path (L=300 -> 3 tiles of 128 with carried causal halo
    #    and ragged end-padding), exercising the grid/carry logic.
    params3 = _make_params(kp3, 4, 8, K, with_downsample=True)
    x3 = jax.random.normal(kx3, (2, 4, 300), jnp.float32)
    _check(x3, params3, K=K, dilation=dil, time_tile=128)

    print("KERNEL_OK")
</pallas_src>

<mosaic_0001>
module attributes {stable_mosaic.version = 11 : i64} {
  func.func @_temporal_block_kernel(%arg0: i32, %arg1: i32, %arg2: memref<1x4x16xf32, #tpu.memory_space<vmem>>, %arg3: memref<8x12xf32, #tpu.memory_space<vmem>>, %arg4: memref<8x1xf32, #tpu.memory_space<vmem>>, %arg5: memref<8x28xf32, #tpu.memory_space<vmem>>, %arg6: memref<8x1xf32, #tpu.memory_space<vmem>>, %arg7: memref<1x8x16xf32, #tpu.memory_space<vmem>>, %arg8: memref<4x4xf32, #tpu.memory_space<vmem>>, %arg9: memref<8x4xf32, #tpu.memory_space<vmem>>) attributes {dimension_semantics = [#tpu.dimension_semantics<parallel>, #tpu.dimension_semantics<arbitrary>], iteration_bounds = array<i64: 2, 1>, scalar_prefetch = 0 : i64, scratch_operands = 2 : i64, tpu.core_type = #tpu.core_type<tc>, window_params = [{transform_indices = @transform_0, window_bounds = array<i64: 1, 4, 16>}, {pipeline_mode = #tpu.pipeline_mode<synchronous>, transform_indices = @transform_1, window_bounds = array<i64: 8, 12>}, {pipeline_mode = #tpu.pipeline_mode<synchronous>, transform_indices = @transform_2, window_bounds = array<i64: 8, 1>}, {pipeline_mode = #tpu.pipeline_mode<synchronous>, transform_indices = @transform_3, window_bounds = array<i64: 8, 28>}, {pipeline_mode = #tpu.pipeline_mode<synchronous>, transform_indices = @transform_4, window_bounds = array<i64: 8, 1>}, {transform_indices = @transform_5, window_bounds = array<i64: 1, 8, 16>}]} {
    %c0_i32 = arith.constant 0 : i32
    %0 = arith.cmpi eq, %arg1, %c0_i32 : i32
    %1 = arith.extui %0 : i1 to i32
    %c0_i32_0 = arith.constant 0 : i32
    %2 = arith.cmpi ne, %1, %c0_i32_0 : i32
    scf.if %2 {
      %cst_27 = arith.constant 0.000000e+00 : f32
      %44 = vector.broadcast %cst_27 : f32 to vector<4x4xf32>
      %c0_28 = arith.constant 0 : index
      %c0_29 = arith.constant 0 : index
      %45 = vector.load %arg8[%c0_28, %c0_29] : memref<4x4xf32, #tpu.memory_space<vmem>>, vector<4x4xf32>
      tpu.vector_store %arg8[%c0_28, %c0_29], %44 {strides = array<i32>} : memref<4x4xf32, #tpu.memory_space<vmem>>, vector<4x4xf32>,
      %cst_30 = arith.constant 0.000000e+00 : f32
      %46 = vector.broadcast %cst_30 : f32 to vector<8x4xf32>
      %c0_31 = arith.constant 0 : index
      %c0_32 = arith.constant 0 : index
      %47 = vector.load %arg9[%c0_31, %c0_32] : memref<8x4xf32, #tpu.memory_space<vmem>>, vector<8x4xf32>
      tpu.vector_store %arg9[%c0_31, %c0_32], %46 {strides = array<i32>} : memref<8x4xf32, #tpu.memory_space<vmem>>, vector<8x4xf32>,
    } else {
    }
    %c0 = arith.constant 0 : index
    %c0_1 = arith.constant 0 : index
    %c0_2 = arith.constant 0 : index
    %3 = vector.load %arg2[%c0, %c0_1, %c0_2] : memref<1x4x16xf32, #tpu.memory_space<vmem>>, vector<1x4x16xf32>
    %4 = vector.shape_cast %3 : vector<1x4x16xf32> to vector<4x16xf32>
    %c0_3 = arith.constant 0 : index
    %c0_4 = arith.constant 0 : index
    %5 = vector.load %arg8[%c0_3, %c0_4] : memref<4x4xf32, #tpu.memory_space<vmem>>, vector<4x4xf32>
    %6 = tpu.concatenate %5, %4 in 1 : vector<4x4xf32>, vector<4x16xf32> -> vector<4x20xf32>
    %7 = vector.extract_strided_slice %6 {offsets = [0, 0], sizes = [4, 16], strides = [1, 1]} : vector<4x20xf32> to vector<4x16xf32>
    %8 = vector.extract_strided_slice %6 {offsets = [0, 2], sizes = [4, 16], strides = [1, 1]} : vector<4x20xf32> to vector<4x16xf32>
    %9 = vector.extract_strided_slice %6 {offsets = [0, 4], sizes = [4, 16], strides = [1, 1]} : vector<4x20xf32> to vector<4x16xf32>
    %10 = tpu.concatenate %7, %8, %9 in 0 : vector<4x16xf32>, vector<4x16xf32>, vector<4x16xf32> -> vector<12x16xf32>
    %c0_5 = arith.constant 0 : index
    %c0_6 = arith.constant 0 : index
    %11 = vector.load %arg3[%c0_5, %c0_6] : memref<8x12xf32, #tpu.memory_space<vmem>>, vector<8x12xf32>
    %cst = arith.constant dense<0.000000e+00> : vector<8x16xf32>
    %12 = tpu.matmul %11, %10, %cst {dimension_numbers = #tpu.dot_dimension_numbers<[1], [0], [0], [1], [0, 0, 1, 1], [], []>} : vector<8x12xf32>, vector<12x16xf32>, vector<8x16xf32> -> vector<8x16xf32>
    %c0_7 = arith.constant 0 : index
    %c0_8 = arith.constant 0 : index
    %13 = vector.load %arg4[%c0_7, %c0_8] : memref<8x1xf32, #tpu.memory_space<vmem>>, vector<8x1xf32>
    %14 = vector.broadcast %13 : vector<8x1xf32> to vector<8x16xf32>
    %15 = arith.addf %12, %14 : vector<8x16xf32>
    %cst_9 = arith.constant 0.000000e+00 : f32
    %16 = vector.broadcast %cst_9 : f32 to vector<8x16xf32>
    %17 = arith.maximumf %15, %16 : vector<8x16xf32>
    %c0_10 = arith.constant 0 : index
    %c0_11 = arith.constant 0 : index
    %18 = vector.load %arg9[%c0_10, %c0_11] : memref<8x4xf32, #tpu.memory_space<vmem>>, vector<8x4xf32>
    %19 = tpu.concatenate %18, %17 in 1 : vector<8x4xf32>, vector<8x16xf32> -> vector<8x20xf32>
    %20 = vector.extract_strided_slice %19 {offsets = [0, 0], sizes = [8, 16], strides = [1, 1]} : vector<8x20xf32> to vector<8x16xf32>
    %21 = vector.extract_strided_slice %19 {offsets = [0, 2], sizes = [8, 16], strides = [1, 1]} : vector<8x20xf32> to vector<8x16xf32>
    %22 = vector.extract_strided_slice %19 {offsets = [0, 4], sizes = [8, 16], strides = [1, 1]} : vector<8x20xf32> to vector<8x16xf32>
    %23 = tpu.concatenate %20, %21, %22, %4 in 0 : vector<8x16xf32>, vector<8x16xf32>, vector<8x16xf32>, vector<4x16xf32> -> vector<28x16xf32>
    %c0_12 = arith.constant 0 : index
    %c0_13 = arith.constant 0 : index
    %24 = vector.load %arg5[%c0_12, %c0_13] : memref<8x28xf32, #tpu.memory_space<vmem>>, vector<8x28xf32>
    %cst_14 = arith.constant dense<0.000000e+00> : vector<8x16xf32>
    %25 = tpu.matmul %24, %23, %cst_14 {dimension_numbers = #tpu.dot_dimension_numbers<[1], [0], [0], [1], [0, 0, 1, 1], [], []>} : vector<8x28xf32>, vector<28x16xf32>, vector<8x16xf32> -> vector<8x16xf32>
    %c0_15 = arith.constant 0 : index
    %c0_16 = arith.constant 0 : index
    %26 = vector.load %arg6[%c0_15, %c0_16] : memref<8x1xf32, #tpu.memory_space<vmem>>, vector<8x1xf32>
    %27 = vector.broadcast %26 : vector<8x1xf32> to vector<8x16xf32>
    %28 = arith.addf %25, %27 : vector<8x16xf32>
    %c0_17 = arith.constant 0 : index
    %c24 = arith.constant 24 : index
    %29 = vector.load %arg5[%c0_17, %c24] : memref<8x28xf32, #tpu.memory_space<vmem>>, vector<8x4xf32>
    %c0_18 = arith.constant 0 : index
    %c0_19 = arith.constant 0 : index
    %30 = vector.load %arg6[%c0_18, %c0_19] : memref<8x1xf32, #tpu.memory_space<vmem>>, vector<8x1xf32>
    %cst_20 = arith.constant 0.000000e+00 : f32
    %31 = vector.broadcast %cst_20 : f32 to vector<8x1xf32>
    %32 = arith.mulf %30, %31 : vector<8x1xf32>
    %cst_21 = arith.constant dense<0.000000e+00> : vector<8x16xf32>
    %33 = tpu.matmul %29, %4, %cst_21 {dimension_numbers = #tpu.dot_dimension_numbers<[1], [0], [0], [1], [0, 0, 1, 1], [], []>} : vector<8x4xf32>, vector<4x16xf32>, vector<8x16xf32> -> vector<8x16xf32>
    %34 = vector.broadcast %32 : vector<8x1xf32> to vector<8x16xf32>
    %35 = arith.addf %33, %34 : vector<8x16xf32>
    %36 = arith.subf %28, %35 : vector<8x16xf32>
    %cst_22 = arith.constant 0.000000e+00 : f32
    %37 = vector.broadcast %cst_22 : f32 to vector<8x16xf32>
    %38 = arith.maximumf %36, %37 : vector<8x16xf32>
    %39 = arith.addf %38, %35 : vector<8x16xf32>
    %cst_23 = arith.constant 0.000000e+00 : f32
    %40 = vector.broadcast %cst_23 : f32 to vector<8x16xf32>
    %41 = arith.maximumf %39, %40 : vector<8x16xf32>
    %42 = vector.shape_cast %41 : vector<8x16xf32> to vector<1x8x16xf32>
    %c0_24 = arith.constant 0 : index
    %c0_25 = arith.constant 0 : index
    %c0_26 = arith.constant 0 : index
    %43 = vector.load %arg7[%c0_24, %c0_25, %c0_26] : memref<1x8x16xf32, #tpu.memory_space<vmem>>, vector<1x8x16xf32>
    tpu.vector_store %arg7[%c0_24, %c0_25, %c0_26], %42 {strides = array<i32>} : memref<1x8x16xf32, #tpu.memory_space<vmem>>, vector<1x8x16xf32>,
    return
  }
  func.func @transform_0(%arg0: i32, %arg1: i32) -> (i32, i32, i32) {
    %c0_i32 = arith.constant 0 : i32
    %c0_i32_0 = arith.constant 0 : i32
    return %arg0, %c0_i32, %arg1 : i32, i32, i32
  }
  func.func @transform_1(%arg0: i32, %arg1: i32) -> (i32, i32) {
    %c0_i32 = arith.constant 0 : i32
    %c0_i32_0 = arith.constant 0 : i32
    %c0_i32_1 = arith.constant 0 : i32
    return %c0_i32, %c0_i32_0 : i32, i32
  }
  func.func @transform_2(%arg0: i32, %arg1: i32) -> (i32, i32) {
    %c0_i32 = arith.constant 0 : i32
    %c0_i32_0 = arith.constant 0 : i32
    %c0_i32_1 = arith.constant 0 : i32
    return %c0_i32, %c0_i32_0 : i32, i32
  }
  func.func @transform_3(%arg0: i32, %arg1: i32) -> (i32, i32) {
    %c0_i32 = arith.constant 0 : i32
    %c0_i32_0 = arith.constant 0 : i32
    %c0_i32_1 = arith.constant 0 : i32
    return %c0_i32, %c0_i32_0 : i32, i32
  }
  func.func @transform_4(%arg0: i32, %arg1: i32) -> (i32, i32) {
    %c0_i32 = arith.constant 0 : i32
    %c0_i32_0 = arith.constant 0 : i32
    %c0_i32_1 = arith.constant 0 : i32
    return %c0_i32, %c0_i32_0 : i32, i32
  }
  func.func @transform_5(%arg0: i32, %arg1: i32) -> (i32, i32, i32) {
    %c0_i32 = arith.constant 0 : i32
    %c0_i32_0 = arith.constant 0 : i32
    return %arg0, %c0_i32, %arg1 : i32, i32, i32
  }
}

</mosaic_0001>

<llo_original>
// kernel: tpu_custom_call.1
$region0: #{tpu_custom_call.1}
  #allocation0 [shape = 'u32[]', space=smem, size = 0x4, offset = 0x4, fixed_abs, tag = 'smem constant byte address 0x4 - core index']
  #allocation1 [shape = 'u32[72,128]{1,0:T(1,128)}', space=vmem, size = 0x9000, scoped, tag = 'internal scratch']
  #allocation2 [shape = 'f32[4,4]{1,0:T(4,128)}', space=vmem, size = 0x800, scoped, tag = 'scratch operand']
  #allocation3 [shape = 'f32[8,4]{1,0:T(8,128)}', space=vmem, size = 0x1000, scoped, tag = 'scratch operand']
  %s0 = inlined_call_operand.vmem [shape: f32[2,4,16], index: 0, kind: input, shape index: {}]
  %s1 = inlined_call_operand.vmem [shape: f32[8,12], index: 1, kind: input, shape index: {}]
  %s2 = inlined_call_operand.vmem [shape: f32[8,1], index: 2, kind: input, shape index: {}]
  %s3 = inlined_call_operand.hbm [shape: f32[8,28], index: 3, kind: input, shape index: {}]
  %s4 = inlined_call_operand.vmem [shape: f32[8,1], index: 4, kind: input, shape index: {}]
  %s5 = inlined_call_operand.hbm [shape: f32[2,8,16], index: 5, kind: output, shape index: {}]
  %s6 = sld [smem:[#allocation0]]
  $region61: #{tpu_custom_call.1} parent=0
    _
  %s8 = ssub.s32 1, %s6
  %s9 = scalar_select 0, %s8, %s6
  $region1: #{tpu_custom_call.1} parent=0
    #allocation4 [shape = 'u8[4096]{0}', space=vmem, size = 0x1000, scoped, tag = 'input window, operand 3, single buffered']
    #allocation5 [shape = 's32[2]{0}', space=sflag, size = 0x8, scoped, tag = 'scoped memory for tpu_custom_call.1']
    #allocation6 [shape = 's32[2]{0}', space=sflag, size = 0x8, scoped, tag = 'scoped memory for tpu_custom_call.1']
    #allocation7 [shape = 'u8[8192]{0}', space=vmem, size = 0x2000, scoped, tag = 'output window, operand 0']
    %10 = vsyncpa [#allocation5], 0
    %11 = vsyncpa [#allocation6], 0
    %s12 = scalar_lea.sflag [#allocation6], 1
    %13 = vsyncpa %s12, 0
    loop: start=0, step=1, limit=4
    $region2: #{tpu_custom_call.1} parent=1 // loop_pre_header
      _
    $region3: #{tpu_custom_call.1} parent=1 // loop_header
      %s15 = sphi 0, %s19
      %p16 = scmp.ge.s32.totalorder %s15, 4
      %s22 = sphi 0, %s34
      %s23 = sphi 0, %s30
      %s24 = sphi 0, %s22
      %s25 = sphi 0, %s23
      %s26 = sphi 0, %s24
      %s27 = sphi 0, %s25
      %s39 = sphi 0, %s41
      %s42 = sphi 0, %s39
      %s43 = sphi 0, %s42
      %s59 = sphi 0, %s43
      %s63 = sphi 0, %s63
      %s65 = sphi 0, %s63
      %s66 = sphi 0, %s65
      %s80 = sphi 0, %s66
      %s84 = sphi 0, %s84
      %s86 = sphi 0, %s84
      %s87 = sphi 0, %s86
      %s101 = sphi 0, %s87
      %s105 = sphi 0, %s105
      %s107 = sphi 0, %s105
      %s108 = sphi 0, %s107
      %s122 = sphi 0, %s108
      %s126 = sphi 0, %s126
      %s128 = sphi 0, %s126
      %s129 = sphi 0, %s128
      %s143 = sphi 0, %s129
      %s151 = sphi 0, %s153
      %s154 = sphi 0, %s151
      %s155 = sphi 0, %s154
      %s171 = sphi 0, %s155
    $region4: #{tpu_custom_call.1} parent=1 // loop_header_branch
      %18 = sbr.rel (%p16) target = $region8
    $region5: #{tpu_custom_call.1} parent=1 // loop_body
      %s20 = ssub.s32 %s15, 1
      %s21 = ssub.s32 %s15, 2
      %s28 = sadd.s32 1, %s23
      %p29 = scmp.ge.s32.totalorder %s28, 1
      %s30 = scalar_select %p29, 0, %s28
      %s31 = sadd.s32 1, %s22
      %s32 = scalar_select %p29, %s31, %s22
      %p33 = scmp.ge.s32.totalorder %s32, 2
      %s34 = scalar_select %p33, 0, %s32
      %s35 = ssub.s32 %s22, %s34
      %s36 = ssub.s32 %s23, %s30
      %s37 = sor.u32 %s35, %s36
      %p38 = scmp.eq.s32.totalorder %s37, 0
      %s40 = sadd.s32 %s39, 1
      %s41 = scalar_select %p38, %s39, %s40
      %p44 = pneg %p38
      %p45 = scmp.eq.s32.totalorder %s15, 1
      %p46 = por %p44, %p45
      %p47 = scmp.ne.s32.totalorder %s39, %s42
      %p48 = scmp.eq.s32.totalorder %s15, 0
      %p49 = por %p47, %p48
      %p50 = scmp.ne.s32.totalorder %s39, %s42
      %p51 = scmp.eq.s32.totalorder %s20, 1
      %p52 = por %p50, %p51
      %p53 = scmp.ne.s32.totalorder %s42, %s43
      %p54 = scmp.eq.s32.totalorder %s20, 0
      %p55 = por %p53, %p54
      %p56 = scmp.ne.s32.totalorder %s42, %s43
      %p57 = scmp.eq.s32.totalorder %s21, 1
      %p58 = por %p56, %p57
      %p60 = scmp.ne.s32.totalorder %s43, %s59
      %p61 = scmp.eq.s32.totalorder %s21, 0
      %p62 = por %p60, %p61
      %s64 = sadd.s32 %s63, 1
      %p67 = scmp.eq.s32.totalorder %s15, 1
      %p68 = scmp.ne.s32.totalorder %s63, %s65
      %p69 = scmp.eq.s32.totalorder %s15, 0
      %p70 = por %p68, %p69
      %p71 = scmp.ne.s32.totalorder %s63, %s65
      %p72 = scmp.eq.s32.totalorder %s20, 1
      %p73 = por %p71, %p72
      %p74 = scmp.ne.s32.totalorder %s65, %s66
      %p75 = scmp.eq.s32.totalorder %s20, 0
      %p76 = por %p74, %p75
      %p77 = scmp.ne.s32.totalorder %s65, %s66
      %p78 = scmp.eq.s32.totalorder %s21, 1
      %p79 = por %p77, %p78
      %p81 = scmp.ne.s32.totalorder %s66, %s80
      %p82 = scmp.eq.s32.totalorder %s21, 0
      %p83 = por %p81, %p82
      %s85 = sadd.s32 %s84, 1
      %p88 = scmp.eq.s32.totalorder %s15, 1
      %p89 = scmp.ne.s32.totalorder %s84, %s86
      %p90 = scmp.eq.s32.totalorder %s15, 0
      %p91 = por %p89, %p90
      %p92 = scmp.ne.s32.totalorder %s84, %s86
      %p93 = scmp.eq.s32.totalorder %s20, 1
      %p94 = por %p92, %p93
      %p95 = scmp.ne.s32.totalorder %s86, %s87
      %p96 = scmp.eq.s32.totalorder %s20, 0
      %p97 = por %p95, %p96
      %p98 = scmp.ne.s32.totalorder %s86, %s87
      %p99 = scmp.eq.s32.totalorder %s21, 1
      %p100 = por %p98, %p99
      %p102 = scmp.ne.s32.totalorder %s87, %s101
      %p103 = scmp.eq.s32.totalorder %s21, 0
      %p104 = por %p102, %p103
      %s106 = sadd.s32 %s105, 1
      %p109 = scmp.eq.s32.totalorder %s15, 1
      %p110 = scmp.ne.s32.totalorder %s105, %s107
      %p111 = scmp.eq.s32.totalorder %s15, 0
      %p112 = por %p110, %p111
      %p113 = scmp.ne.s32.totalorder %s105, %s107
      %p114 = scmp.eq.s32.totalorder %s20, 1
      %p115 = por %p113, %p114
      %p116 = scmp.ne.s32.totalorder %s107, %s108
      %p117 = scmp.eq.s32.totalorder %s20, 0
      %p118 = por %p116, %p117
      %p119 = scmp.ne.s32.totalorder %s107, %s108
      %p120 = scmp.eq.s32.totalorder %s21, 1
      %p121 = por %p119, %p120
      %p123 = scmp.ne.s32.totalorder %s108, %s122
      %p124 = scmp.eq.s32.totalorder %s21, 0
      %p125 = por %p123, %p124
      %s127 = sadd.s32 %s126, 1
      %p130 = scmp.eq.s32.totalorder %s15, 1
      %p131 = scmp.ne.s32.totalorder %s126, %s128
      %p132 = scmp.eq.s32.totalorder %s15, 0
      %p133 = por %p131, %p132
      %p134 = scmp.ne.s32.totalorder %s126, %s128
      %p135 = scmp.eq.s32.totalorder %s20, 1
      %p136 = por %p134, %p135
      %p137 = scmp.ne.s32.totalorder %s128, %s129
      %p138 = scmp.eq.s32.totalorder %s20, 0
      %p139 = por %p137, %p138
      %p140 = scmp.ne.s32.totalorder %s128, %s129
      %p141 = scmp.eq.s32.totalorder %s21, 1
      %p142 = por %p140, %p141
      %p144 = scmp.ne.s32.totalorder %s129, %s143
      %p145 = scmp.eq.s32.totalorder %s21, 0
      %p146 = por %p144, %p145
      %s147 = ssub.s32 %s22, %s34
      %s148 = ssub.s32 %s23, %s30
      %s149 = sor.u32 %s147, %s148
      %p150 = scmp.eq.s32.totalorder %s149, 0
      %s152 = sadd.s32 %s151, 1
      %s153 = scalar_select %p150, %s151, %s152
      %p156 = pneg %p150
      %p157 = scmp.eq.s32.totalorder %s15, 1
      %p158 = por %p156, %p157
      %p159 = scmp.ne.s32.totalorder %s151, %s154
      %p160 = scmp.eq.s32.totalorder %s15, 0
      %p161 = por %p159, %p160
      %p162 = scmp.ne.s32.totalorder %s151, %s154
      %p163 = scmp.eq.s32.totalorder %s20, 1
      %p164 = por %p162, %p163
      %p165 = scmp.ne.s32.totalorder %s154, %s155
      %p166 = scmp.eq.s32.totalorder %s20, 0
      %p167 = por %p165, %p166
      %p168 = scmp.ne.s32.totalorder %s154, %s155
      %p169 = scmp.eq.s32.totalorder %s21, 1
      %p170 = por %p168, %p169
      %p172 = scmp.ne.s32.totalorder %s155, %s171
      %p173 = scmp.eq.s32.totalorder %s21, 0
      %p174 = por %p172, %p173
      %p175 = scmp.le.s32.totalorder 1, %s15
      %p176 = scmp.lt.s32.totalorder %s15, 3
      %p177 = pnand %p175, %p176
      %p178 = pneg %p177
      // Predicated region
      $region9: #{tpu_custom_call.1} parent=5 // pred_check
        _
      $region10: #{tpu_custom_call.1} parent=5 // pred_check_branch
        %180 = sbr.rel (%p177) target = $region12
      $region11: #{tpu_custom_call.1} parent=5 // pred_region
        %s181 = ssub.s32 %s15, 1
        // Predicated region
        $region13: #{tpu_custom_call.1} parent=11 // pred_check
          %p182 = pneg %p76
        $region14: #{tpu_custom_call.1} parent=11 // pred_check_branch
          %184 = sbr.rel (%p182) target = $region16
        $region15: #{tpu_custom_call.1} parent=11 // pred_region
          _
        $region16: #{tpu_custom_call.1} parent=11 // pred_fallthru
          _
        // Predicated region
        $region17: #{tpu_custom_call.1} parent=11 // pred_check
          %p185 = pneg %p97
        $region18: #{tpu_custom_call.1} parent=11 // pred_check_branch
          %187 = sbr.rel (%p185) target = $region20
        $region19: #{tpu_custom_call.1} parent=11 // pred_region
          _
        $region20: #{tpu_custom_call.1} parent=11 // pred_fallthru
          _
        // Predicated region
        $region21: #{tpu_custom_call.1} parent=11 // pred_check
          %p188 = pneg %p118
        $region22: #{tpu_custom_call.1} parent=11 // pred_check_branch
          %190 = sbr.rel (%p188) target = $region24
        $region23: #{tpu_custom_call.1} parent=11 // pred_region
          %192 = vsyncadd [#allocation5], 0
          %s194 = sshll.u32 %s3, 4
          %s195 = int_to_ptr.hbm [resolvable:$true] %s194
          %s196 = sshll.u32 [#allocation4], 4
          %s197 = int_to_ptr.vmem [resolvable:$true] %s196
          %199 = dma.hbm_to_vmem [thread:$0]  %s195, 128, %s197, [#allocation5]
        $region24: #{tpu_custom_call.1} parent=11 // pred_fallthru
          _
        // Predicated region
        $region25: #{tpu_custom_call.1} parent=11 // pred_check
          %p200 = pneg %p139
        $region26: #{tpu_custom_call.1} parent=11 // pred_check_branch
          %202 = sbr.rel (%p200) target = $region28
        $region27: #{tpu_custom_call.1} parent=11 // pred_region
          _
        $region28: #{tpu_custom_call.1} parent=11 // pred_fallthru
          _
      $region12: #{tpu_custom_call.1} parent=5 // pred_fallthru
        _
      %p203 = scmp.lt.s32.totalorder %s15, 2
      // Predicated region
      $region29: #{tpu_custom_call.1} parent=5 // pred_check
        %p204 = pneg %p203
      $region30: #{tpu_custom_call.1} parent=5 // pred_check_branch
        %206 = sbr.rel (%p204) target = $region32
      $region31: #{tpu_custom_call.1} parent=5 // pred_region
        // Predicated region
        $region33: #{tpu_custom_call.1} parent=31 // pred_check
          %p207 = pneg %p49
        $region34: #{tpu_custom_call.1} parent=31 // pred_check_branch
          %209 = sbr.rel (%p207) target = $region36
        $region35: #{tpu_custom_call.1} parent=31 // pred_region
          %p210 = scmp.lt.s32.totalorder %s22, 1
          %s211 = scalar_select %p210, %s22, 1
          %p212 = scmp.lt.s32.totalorder %s23, 0
          %s213 = scalar_select %p212, %s23, 0
          %s214 = sadd.s32 %s213, %s211
          %s215 = smul.addr %s214, 4
          %s216 = scalar_lea.vmem %s0, %s215
        $region36: #{tpu_custom_call.1} parent=31 // pred_fallthru
          _
      $region32: #{tpu_custom_call.1} parent=5 // pred_fallthru
        _
      %p217 = scmp.le.s32.totalorder 1, %s15
      %p218 = scmp.lt.s32.totalorder %s15, 3
      %p219 = pnand %p217, %p218
      %p220 = pneg %p219
      // Predicated region
      $region37: #{tpu_custom_call.1} parent=5 // pred_check
        _
      $region38: #{tpu_custom_call.1} parent=5 // pred_check_branch
        %222 = sbr.rel (%p219) target = $region40
      $region39: #{tpu_custom_call.1} parent=5 // pred_region
        %s223 = ssub.s32 %s15, 1
        // Predicated region
        $region41: #{tpu_custom_call.1} parent=39 // pred_check
          %p224 = pneg %p118
        $region42: #{tpu_custom_call.1} parent=39 // pred_check_branch
          %226 = sbr.rel (%p224) target = $region44
        $region43: #{tpu_custom_call.1} parent=39 // pred_region
          %228 = dma.done [#allocation5], 128
        $region44: #{tpu_custom_call.1} parent=39 // pred_fallthru
          _
        %p229 = scmp.lt.s32.totalorder %s24, 1
        %s230 = scalar_select %p229, %s24, 1
        %p231 = scmp.lt.s32.totalorder %s25, 0
        %s232 = scalar_select %p231, %s25, 0
        %s233 = sadd.s32 %s232, %s230
        %s234 = smul.addr %s233, 4
        %s235 = scalar_lea.vmem %s0, %s234
        %p236 = pneg %p55
        %p237 = pneg %p52
        %p238 = pneg %p76
        %p239 = pneg %p73
        %p240 = pneg %p97
        %p241 = pneg %p94
        %p242 = pneg %p118
        %p243 = pneg %p115
        %p244 = pneg %p139
        %p245 = pneg %p136
        %p246 = pneg %p167
        %p247 = pneg %p164
        %s248 = sand.u32 %s154, 1
        %s249 = scalar_lea.sflag [#allocation6], %s248
        %s250 = sand.u32 %s154, 1
        %s251 = smul.addr %s250, 8
        %s252 = scalar_lea.vmem [#allocation7], %s251
        %p253 = scmp.lt.s32.totalorder %s24, 1
        %s254 = scalar_select %p253, %s24, 1
        %p255 = scmp.lt.s32.totalorder %s25, 0
        %s256 = scalar_select %p255, %s25, 0
        %s257 = sadd.s32 %s256, %s254
        %s258 = smul.addr %s257, 4
        %s259 = scalar_lea.vmem %s0, %s258
        %p260 = scmp.eq.s32.totalorder %s25, 0
        // Predicated region
        $region45: #{tpu_custom_call.1} parent=39 // pred_check
          %p261 = pneg %p260
        $region46: #{tpu_custom_call.1} parent=39 // pred_check_branch
          %263 = sbr.rel (%p261) target = $region48
        $region47: #{tpu_custom_call.1} parent=39 // pred_region
          %vm264 = vcmask 27648
          %265 = vst.msk [vmem:[#allocation2] sm:$0xf] %vm264, 0.0
          %vm266 = vcmask 31744
          %267 = vst.msk [vmem:[#allocation3] sm:$0xff] %vm266, 0.0
        $region48: #{tpu_custom_call.1} parent=39 // pred_fallthru
          _
        %v268 = vld [vmem:[%s259] sm:$0xf]
        %v269 = vld [vmem:[#allocation2] sm:$0xf]
        %271 = vrot.lane.b32.xlu0 %v268, 4
        %v272 = vpop.permute.xlu0 %271
        %vm274 = vcmask 31744
        %v275 = vsel %vm274, %v269, %v272
        %v277 = vrot.slane %v275, 4
        %278 = vrot.lane.b32.xlu0 %v277, 126
        %v279 = vpop.permute.xlu0 %278
        %281 = vrot.lane.b32.xlu0 %v275, 124
        %v282 = vpop.permute.xlu0 %281
        %vm283 = vcmask 1043456
        %v284 = vsel %vm283, %v275, %v279
        %v285 = vld [vmem:[%s1] sm:$0xff]
        %v286 = vld [vmem:[%s2] sm:$0xff]
        %288 = vset.pattern.permute.xlu0 0
        %289 = vperm.xlu0 %288, %v286
        %v290 = vpop.permute.xlu0 %289
        %vm292 = vcmask 97280
        %v294 = vsel %vm292, %v285, 0
        %v296 = vsel %vm283, %v282, 0
        %298 = vmatpush.msra.mxu0 0.0
        %299 = vmatpush.msra.mxu0 0.0
        %300 = vmatpush.msra.mxu0 0.0
        %301 = vmatpush.msra.mxu0 0.0
        %302 = vmatpush.msra.mxu0 0.0
        %303 = vmatpush.msra.mxu0 0.0
        %304 = vmatpush.msra.mxu0 0.0
        %305 = vmatpush.msra.mxu0 0.0
        %306 = vmatpush.msra.mxu0 0.0
        %307 = vmatpush.msra.mxu0 0.0
        %308 = vmatpush.msra.mxu0 0.0
        %309 = vmatpush.msra.mxu0 0.0
        %310 = vmatpush.msra.mxu0 0.0
        %311 = vmatpush.msra.mxu0 0.0
        %312 = vmatpush.msra.mxu0 %v296
        %313 = vmatpush.msra.mxu0 %v284
        %314 = vmatmul.f32.gmra.mxu0 %v294
        %v315 = vpop.f32.mrf.mxu0
        %v316 = vadd.f32 %v290, %v315
        %317 = vdwg.mxu0
        %v318 = vmax.f32 %v316, 0.0
        %v319 = vld [vmem:[#allocation3] sm:$0xff]
        %321 = vrot.lane.b32.xlu0 %v318, 4
        %v322 = vpop.permute.xlu0 %321
        %v324 = vsel %vm274, %v319, %v322
        %326 = vrot.lane.b32.xlu0 %v324, 126
        %v327 = vpop.permute.xlu0 %326
        %329 = vrot.lane.b32.xlu0 %v324, 124
        %v330 = vpop.permute.xlu0 %329
        %v332 = vld [vmem:[#allocation4] sm:$0xff]
        %v333 = vld [vmem:[%s4] sm:$0xff]
        %335 = vset.pattern.permute.xlu0 0
        %336 = vperm.xlu0 %335, %v333
        %v337 = vpop.permute.xlu0 %336
        %vm339 = vcmask 228352
        %v341 = vsel %vm339, %v332, 0
        %v343 = vsel %vm283, %v268, 0
        %345 = vmatpush.msra.mxu0 0.0
        %346 = vmatpush.msra.mxu0 0.0
        %347 = vmatpush.msra.mxu0 0.0
        %348 = vmatpush.msra.mxu0 0.0
        %349 = vmatpush.msra.mxu0 0.0
        %350 = vmatpush.msra.mxu0 0.0
        %351 = vmatpush.msra.mxu0 0.0
        %352 = vmatpush.msra.mxu0 0.0
        %353 = vmatpush.msra.mxu0 0.0
        %354 = vmatpush.msra.mxu0 0.0
        %355 = vmatpush.msra.mxu0 0.0
        %356 = vmatpush.msra.mxu0 0.0
        %357 = vmatpush.msra.mxu0 %v343
        %358 = vmatpush.msra.mxu0 %v330
        %359 = vmatpush.msra.mxu0 %v327
        %360 = vmatpush.msra.mxu0 %v324
        %361 = vmatmul.f32.gmra.mxu0 %v341
        %v362 = vpop.f32.mrf.mxu0
        %v363 = vadd.f32 %v337, %v362
        %364 = vdwg.mxu0
        %v365 = vmul.f32 %v333, 0.0
        %367 = vset.pattern.permute.xlu0 0
        %368 = vperm.xlu0 %367, %v365
        %v369 = vpop.permute.xlu0 %368
        %371 = vrot.lane.b32.xlu0 %v332, 104
        %v372 = vpop.permute.xlu0 %371
        %v373 = vsel %vm274, %v372, 0
        %375 = vmatpush.msra.mxu0 0.0
        %376 = vmatpush.msra.mxu0 0.0
        %377 = vmatpush.msra.mxu0 0.0
        %378 = vmatpush.msra.mxu0 0.0
        %379 = vmatpush.msra.mxu0 0.0
        %380 = vmatpush.msra.mxu0 0.0
        %381 = vmatpush.msra.mxu0 0.0
        %382 = vmatpush.msra.mxu0 0.0
        %383 = vmatpush.msra.mxu0 0.0
        %384 = vmatpush.msra.mxu0 0.0
        %385 = vmatpush.msra.mxu0 0.0
        %386 = vmatpush.msra.mxu0 0.0
        %387 = vmatpush.msra.mxu0 0.0
        %388 = vmatpush.msra.mxu0 0.0
        %389 = vmatpush.msra.mxu0 0.0
        %390 = vmatpush.msra.mxu0 %v343
        %391 = vmatmul.f32.gmra.mxu0 %v373
        %v392 = vpop.f32.mrf.mxu0
        %v393 = vadd.f32 %v369, %v392
        %394 = vdwg.mxu0
        %v395 = vsub.f32 %v363, %v393
        %v396 = vmax.f32 %v395, 0.0
        %v397 = vadd.f32 %v396, %v393
        %v398 = vmax.f32 %v397, 0.0
        %vm399 = vcmask 130048
        %400 = vst.msk [vmem:[%s252] sm:$0xff] %vm399, %v398
        %s401 = sand.u32 %s154, 1
        %s402 = scalar_lea.sflag [#allocation6], %s401
        %s403 = sand.u32 %s154, 1
        %s404 = smul.addr %s403, 8
        %s405 = scalar_lea.vmem [#allocation7], %s404
        // Predicated region
        $region49: #{tpu_custom_call.1} parent=39 // pred_check
          %p406 = pneg %p164
        $region50: #{tpu_custom_call.1} parent=39 // pred_check_branch
          %408 = sbr.rel (%p406) target = $region52
        $region51: #{tpu_custom_call.1} parent=39 // pred_region
          %410 = vsyncadd %s402, 0
          %s411 = sadd.s32 %s25, %s24
          %s412 = smul.addr %s411, 8
          %s413 = scalar_lea.hbm %s5, %s412
          %s415 = sshll.u32 %s405, 4
          %s416 = int_to_ptr.vmem [resolvable:$true] %s415
          %s417 = sshll.u32 %s413, 4
          %s418 = int_to_ptr.hbm [resolvable:$true] %s417
          %420 = dma.vmem_to_hbm [thread:$0]  %s416, 128, %s418, %s402
        $region52: #{tpu_custom_call.1} parent=39 // pred_fallthru
          _
      $region40: #{tpu_custom_call.1} parent=5 // pred_fallthru
        _
      %p421 = scmp.le.s32.totalorder 2, %s15
      // Predicated region
      $region53: #{tpu_custom_call.1} parent=5 // pred_check
        %p422 = pneg %p421
      $region54: #{tpu_custom_call.1} parent=5 // pred_check_branch
        %424 = sbr.rel (%p422) target = $region56
      $region55: #{tpu_custom_call.1} parent=5 // pred_region
        %s425 = ssub.s32 %s15, 2
        // Predicated region
        $region57: #{tpu_custom_call.1} parent=55 // pred_check
          %p426 = pneg %p170
        $region58: #{tpu_custom_call.1} parent=55 // pred_check_branch
          %428 = sbr.rel (%p426) target = $region60
        $region59: #{tpu_custom_call.1} parent=55 // pred_region
          %s429 = sand.u32 %s155, 1
          %s430 = scalar_lea.sflag [#allocation6], %s429
          %s431 = sand.u32 %s155, 1
          %s432 = smul.addr %s431, 8
          %s433 = scalar_lea.vmem [#allocation7], %s432
          %435 = dma.done %s430, 128
        $region60: #{tpu_custom_call.1} parent=55 // pred_fallthru
          _
      $region56: #{tpu_custom_call.1} parent=5 // pred_fallthru
        _
    $region6: #{tpu_custom_call.1} parent=1 // loop_footer
      %s19 = sadd.s32 1, %s15
    $region7: #{tpu_custom_call.1} parent=1 // loop_footer_branch
      %14 = sbr.rel target = $region3
    $region8: #{tpu_custom_call.1} parent=1 // loop_exit
      _
    %436 = vsyncpa [#allocation5], 1
    %s437 = scalar_lea.sflag [#allocation5], 1
    %438 = vsyncpa %s437, 1
    %439 = vsyncpa [#allocation6], 1
    %s440 = scalar_lea.sflag [#allocation6], 1
    %441 = vsyncpa %s440, 1

</llo_original>
